<compile_context>
chip_gen: v6e
topology: v6e:2x2x1
jax: 0.10.0
libtpu: 0.0.40
codegen_flags: <defaults>
</compile_context>

<pallas_src>
import functools

import jax
import jax.numpy as jnp
from jax.experimental import pallas as pl
from jax.experimental.pallas import tpu as pltpu


def _round_up(x, m):
    return ((x + m - 1) // m) * m


def _embed_drop_kernel(seed_ref, idx_ref, emb_ref, out_ref, acc_ref, *, p, training):
    """seed_ref: SMEM (1,) int32 (scalar prefetch)
       idx_ref : VMEM (TN, 1) int32   token ids for this token tile
       emb_ref : VMEM (TV, D)         one vocabulary tile of the table
       out_ref : VMEM (TN, D)         output tile
       acc_ref : VMEM (TN, D) f32     accumulator across vocab tiles
    """
    i = pl.program_id(0)            # token-tile index  ("parallel")
    k = pl.program_id(1)            # vocab-tile index  ("arbitrary" reduction)
    nk = pl.num_programs(1)
    tn, d = out_ref.shape
    tv = emb_ref.shape[0]

    @pl.when(k == 0)
    def _init():
        acc_ref[...] = jnp.zeros_like(acc_ref)

    # --- gather: one-hot selection of this vocab tile's rows, on the MXU ----
    vocab_ids = k * tv + jax.lax.broadcasted_iota(jnp.int32, (tn, tv), 1)
    onehot = (idx_ref[...] == vocab_ids).astype(emb_ref.dtype)        # (TN, TV)
    acc_ref[...] += jnp.dot(onehot, emb_ref[...],
                            preferred_element_type=jnp.float32)       # (TN, D)

    # --- last vocab tile: fuse dropout + single store ------------------------
    @pl.when(k == nk - 1)
    def _finish():
        rows = acc_ref[...]
        if training and 0.0 < p < 1.0:
            # Counter-based uniform bits: hash(seed, global element index).
            tok0 = i * tn
            r = jax.lax.broadcasted_iota(jnp.int32, (tn, d), 0) + tok0
            c = jax.lax.broadcasted_iota(jnp.int32, (tn, d), 1)
            gid = (r * d + c).astype(jnp.uint32)
            x = gid + seed_ref[0].astype(jnp.uint32) * jnp.uint32(0x9E3779B9)
            # murmur3 fmix32 finalizer (good avalanche for sequential counters)
            x = x ^ (x >> 16)
            x = x * jnp.uint32(0x85EBCA6B)
            x = x ^ (x >> 13)
            x = x * jnp.uint32(0xC2B2AE35)
            x = x ^ (x >> 16)
            thresh = jnp.uint32(min(int(p * 4294967296.0), 4294967295))
            keep = x >= thresh                                 # P(keep) = 1 - p
            scale = jnp.float32(1.0 / (1.0 - p))
            rows = jnp.where(keep, rows * scale, jnp.zeros_like(rows))
        elif training and p >= 1.0:
            rows = jnp.zeros_like(rows)
        out_ref[...] = rows.astype(out_ref.dtype)


def embedding_drop_layer(indices, emb_weight, *, p=0.25, training=False, seed=0,
                         token_tile=256, vocab_tile=512):
    """Forward pass of Embedding_Drop_Layer.

    indices:    (B, S) integer token ids
    emb_weight: (V, D) float embedding table
    returns:    (B, S, D) in emb_weight.dtype
    """
    B, S = indices.shape
    V, D = emb_weight.shape
    N = B * S

    # Token tiling (output / index blocks), padded to sublane multiples.
    tn = min(int(token_tile), _round_up(N, 8))
    n_pad = _round_up(N, tn)
    # Vocab tiling (table streamed through VMEM instead of fully resident).
    tv = min(int(vocab_tile), _round_up(V, 128))
    v_pad = _round_up(V, tv)

    flat_idx = indices.reshape(-1).astype(jnp.int32)
    if n_pad != N:
        flat_idx = jnp.pad(flat_idx, (0, n_pad - N))
    idx2d = flat_idx.reshape(n_pad, 1)

    emb = emb_weight
    if v_pad != V:
        emb = jnp.pad(emb, ((0, v_pad - V), (0, 0)))

    seed_arr = jnp.asarray([seed], dtype=jnp.int32)

    kernel = functools.partial(_embed_drop_kernel, p=float(p),
                               training=bool(training))

    grid = (n_pad // tn, v_pad // tv)

    out_flat = pl.pallas_call(
        kernel,
        out_shape=jax.ShapeDtypeStruct((n_pad, D), emb_weight.dtype),
        grid_spec=pltpu.PrefetchScalarGridSpec(
            num_scalar_prefetch=1,                    # seed lands in SMEM
            grid=grid,
            in_specs=[
                pl.BlockSpec((tn, 1), lambda i, k, seed: (i, 0)),   # token ids
                pl.BlockSpec((tv, D), lambda i, k, seed: (k, 0)),   # table tile
            ],
            out_specs=pl.BlockSpec((tn, D), lambda i, k, seed: (i, 0)),
            scratch_shapes=[pltpu.VMEM((tn, D), jnp.float32)],
        ),
        compiler_params=pltpu.CompilerParams(
            dimension_semantics=("parallel", "arbitrary")),
    )(seed_arr, idx2d, emb)

    return out_flat[:N].reshape(B, S, D)


if __name__ == "__main__":
    key = jax.random.PRNGKey(0)
    k_idx, k_emb = jax.random.split(key)

    vocab_size = 100
    embedding_dim = 32
    batch, seq = 2, 8
    dropout_p = 0.25

    # Deterministic parameter init (nn.Embedding default: N(0, 1)).
    emb_weight = jax.random.normal(k_emb, (vocab_size, embedding_dim), jnp.float32)
    indices = jax.random.randint(k_idx, (batch, seq), 0, vocab_size, jnp.int32)

    # Eval-mode forward (dropout is identity) -- check against pure-JAX ref.
    out_eval = embedding_drop_layer(indices, emb_weight, p=dropout_p, training=False)
    out_eval = jax.block_until_ready(out_eval)
    ref = jnp.take(emb_weight, indices.reshape(-1), axis=0).reshape(
        batch, seq, embedding_dim
    )
    assert out_eval.shape == (batch, seq, embedding_dim)
    # Loose tolerance: the one-hot gather runs through the MXU, whose default
    # f32 matmul precision may round operands to bf16 passes.
    assert jnp.allclose(out_eval, ref, rtol=2e-2, atol=2e-2), "gather mismatch"

    # Training-mode forward (fused in-kernel dropout mask + 1/(1-p) scaling).
    out_train = embedding_drop_layer(
        indices, emb_weight, p=dropout_p, training=True, seed=1234
    )
    out_train = jax.block_until_ready(out_train)
    assert out_train.shape == (batch, seq, embedding_dim)
    kept = out_train != 0.0
    # Surviving entries equal ref / (1 - p); dropped entries are exactly 0.
    assert jnp.allclose(
        jnp.where(kept, out_train, 0.0),
        jnp.where(kept, ref / (1.0 - dropout_p), 0.0),
        rtol=2e-2, atol=3e-2,
    ), "dropout scaling mismatch"
    keep_frac = float(jnp.mean(kept.astype(jnp.float32)))
    assert 0.5 < keep_frac < 0.95, f"implausible keep fraction {keep_frac}"

    print("KERNEL_OK")
</pallas_src>

<mosaic_0001>
module attributes {stable_mosaic.version = 11 : i64} {
  func.func @_embed_drop_kernel(%arg0: i32, %arg1: i32, %arg2: memref<1xi32, #tpu.memory_space<smem>>, %arg3: memref<16x1xi32, #tpu.memory_space<vmem>>, %arg4: memref<128x32xf32, #tpu.memory_space<vmem>>, %arg5: memref<16x32xf32, #tpu.memory_space<vmem>>, %arg6: memref<16x32xf32, #tpu.memory_space<vmem>>) attributes {dimension_semantics = [#tpu.dimension_semantics<parallel>, #tpu.dimension_semantics<arbitrary>], iteration_bounds = array<i64: 1, 1>, scalar_prefetch = 1 : i64, scratch_operands = 1 : i64, tpu.core_type = #tpu.core_type<tc>, window_params = [{transform_indices = @transform_0, window_bounds = array<i64: 16, 1>}, {transform_indices = @transform_1, window_bounds = array<i64: 128, 32>}, {transform_indices = @transform_2, window_bounds = array<i64: 16, 32>}]} {
    %c0_i32 = arith.constant 0 : i32
    %0 = arith.cmpi eq, %arg1, %c0_i32 : i32
    %1 = arith.extui %0 : i1 to i32
    %c0_i32_0 = arith.constant 0 : i32
    %2 = arith.cmpi ne, %1, %c0_i32_0 : i32
    scf.if %2 {
      %cst_10 = arith.constant 0.000000e+00 : f32
      %20 = vector.broadcast %cst_10 : f32 to vector<16x32xf32>
      %c0_11 = arith.constant 0 : index
      %c0_12 = arith.constant 0 : index
      %21 = vector.load %arg6[%c0_11, %c0_12] : memref<16x32xf32, #tpu.memory_space<vmem>>, vector<16x32xf32>
      tpu.vector_store %arg6[%c0_11, %c0_12], %20 {strides = array<i32>} : memref<16x32xf32, #tpu.memory_space<vmem>>, vector<16x32xf32>,
    } else {
    }
    %c128_i32 = arith.constant 128 : i32
    %3 = arith.muli %arg1, %c128_i32 : i32
    %4 = tpu.iota {dimensions = array<i32: 1>} : vector<16x128xi32>
    %5 = vector.broadcast %3 : i32 to vector<16x128xi32>
    %6 = arith.addi %5, %4 : vector<16x128xi32>
    %c0 = arith.constant 0 : index
    %c0_1 = arith.constant 0 : index
    %7 = vector.load %arg3[%c0, %c0_1] : memref<16x1xi32, #tpu.memory_space<vmem>>, vector<16x1xi32>
    %8 = vector.broadcast %7 : vector<16x1xi32> to vector<16x128xi32>
    %9 = arith.cmpi eq, %8, %6 : vector<16x128xi32>
    %10 = arith.extui %9 : vector<16x128xi1> to vector<16x128xi32>
    %11 = arith.sitofp %10 : vector<16x128xi32> to vector<16x128xf32>
    %c0_2 = arith.constant 0 : index
    %c0_3 = arith.constant 0 : index
    %12 = vector.load %arg6[%c0_2, %c0_3] : memref<16x32xf32, #tpu.memory_space<vmem>>, vector<16x32xf32>
    %c0_4 = arith.constant 0 : index
    %c0_5 = arith.constant 0 : index
    %13 = vector.load %arg4[%c0_4, %c0_5] : memref<128x32xf32, #tpu.memory_space<vmem>>, vector<128x32xf32>
    %cst = arith.constant dense<0.000000e+00> : vector<16x32xf32>
    %14 = tpu.matmul %11, %13, %cst {dimension_numbers = #tpu.dot_dimension_numbers<[1], [0], [0], [1], [0, 0, 1, 1], [], []>} : vector<16x128xf32>, vector<128x32xf32>, vector<16x32xf32> -> vector<16x32xf32>
    %15 = arith.addf %12, %14 : vector<16x32xf32>
    %c0_6 = arith.constant 0 : index
    %c0_7 = arith.constant 0 : index
    %16 = vector.load %arg6[%c0_6, %c0_7] : memref<16x32xf32, #tpu.memory_space<vmem>>, vector<16x32xf32>
    tpu.vector_store %arg6[%c0_6, %c0_7], %15 {strides = array<i32>} : memref<16x32xf32, #tpu.memory_space<vmem>>, vector<16x32xf32>,
    %c0_i32_8 = arith.constant 0 : i32
    %17 = arith.cmpi eq, %arg1, %c0_i32_8 : i32
    %18 = arith.extui %17 : i1 to i32
    %c0_i32_9 = arith.constant 0 : i32
    %19 = arith.cmpi ne, %18, %c0_i32_9 : i32
    scf.if %19 {
      %c0_10 = arith.constant 0 : index
      %c0_11 = arith.constant 0 : index
      %20 = vector.load %arg6[%c0_10, %c0_11] : memref<16x32xf32, #tpu.memory_space<vmem>>, vector<16x32xf32>
      %c0_12 = arith.constant 0 : index
      %c0_13 = arith.constant 0 : index
      %21 = vector.load %arg5[%c0_12, %c0_13] : memref<16x32xf32, #tpu.memory_space<vmem>>, vector<16x32xf32>
      tpu.vector_store %arg5[%c0_12, %c0_13], %20 {strides = array<i32>} : memref<16x32xf32, #tpu.memory_space<vmem>>, vector<16x32xf32>,
    } else {
    }
    return
  }
  func.func @transform_0(%arg0: i32, %arg1: i32, %arg2: memref<1xi32, #tpu.memory_space<smem>>) -> (i32, i32) {
    %c0_i32 = arith.constant 0 : i32
    %c0_i32_0 = arith.constant 0 : i32
    return %arg0, %c0_i32 : i32, i32
  }
  func.func @transform_1(%arg0: i32, %arg1: i32, %arg2: memref<1xi32, #tpu.memory_space<smem>>) -> (i32, i32) {
    %c0_i32 = arith.constant 0 : i32
    %c0_i32_0 = arith.constant 0 : i32
    return %arg1, %c0_i32 : i32, i32
  }
  func.func @transform_2(%arg0: i32, %arg1: i32, %arg2: memref<1xi32, #tpu.memory_space<smem>>) -> (i32, i32) {
    %c0_i32 = arith.constant 0 : i32
    %c0_i32_0 = arith.constant 0 : i32
    return %arg0, %c0_i32 : i32, i32
  }
}

</mosaic_0001>

<llo_original>
// kernel: tpu_custom_call.1
$region0: #{tpu_custom_call.1}
  #allocation0 [shape = 'u32[]', space=smem, size = 0x4, offset = 0x4, fixed_abs, tag = 'smem constant byte address 0x4 - core index']
  #allocation1 [shape = 'u32[144,128]{1,0:T(1,128)}', space=vmem, size = 0x12000, scoped, tag = 'internal scratch']
  #allocation2 [shape = 'f32[16,32]{1,0:T(8,128)}', space=vmem, size = 0x2000, scoped, tag = 'scratch operand']
  #allocation3 [shape = 's32[1]{0}', space=sflag, size = 0x4, scoped, tag = 'scoped memory for tpu_custom_call.1']
  #allocation4 [shape = 's32[1]{0:T(128)S(6)}', space=smem, size = 0x200, scoped, tag = 'prefetched SMEM operand 0']
  %s0 = inlined_call_operand.<no memory space> [shape: s32[1], index: 0, kind: input, shape index: {}]
  %s1 = inlined_call_operand.vmem [shape: s32[16,1], index: 1, kind: input, shape index: {}]
  %s2 = inlined_call_operand.vmem [shape: f32[128,32], index: 2, kind: input, shape index: {}]
  %s3 = inlined_call_operand.hbm [shape: f32[16,32], index: 3, kind: output, shape index: {}]
  %s4 = sld [smem:[#allocation0]]
  $region26: #{tpu_custom_call.1} parent=0
    _
  %s6 = ssub.s32 1, %s4
  %s7 = scalar_select 0, %s6, %s4
  %8 = sst [smem:[#allocation4]] %s0
  $region1: #{tpu_custom_call.1} parent=0
    #allocation5 [shape = 'u8[8192]{0}', space=vmem, size = 0x2000, scoped, tag = 'output window, operand 0, single buffered']
    #allocation6 [shape = 's32[1]{0}', space=sflag, size = 0x4, scoped, tag = 'scoped memory for tpu_custom_call.1']
    %9 = vsyncpa [#allocation6], 0
    // Predicated region
    $region2: #{tpu_custom_call.1} parent=1 // pred_check
      _
    $region3: #{tpu_custom_call.1} parent=1 // pred_check_branch
      %11 = sbr.rel (0) target = $region5
    $region4: #{tpu_custom_call.1} parent=1 // pred_region
      _
    $region5: #{tpu_custom_call.1} parent=1 // pred_fallthru
      _
    // Predicated region
    $region6: #{tpu_custom_call.1} parent=1 // pred_check
      _
    $region7: #{tpu_custom_call.1} parent=1 // pred_check_branch
      %13 = sbr.rel (0) target = $region9
    $region8: #{tpu_custom_call.1} parent=1 // pred_region
      _
    $region9: #{tpu_custom_call.1} parent=1 // pred_fallthru
      _
    %p14 = scmp.eq.s32.totalorder 0, 0
    // Predicated region
    $region10: #{tpu_custom_call.1} parent=1 // pred_check
      %p15 = pneg %p14
    $region11: #{tpu_custom_call.1} parent=1 // pred_check_branch
      %17 = sbr.rel (%p15) target = $region13
    $region12: #{tpu_custom_call.1} parent=1 // pred_region
      %vm18 = vcmask 261120
      %19 = vst.msk [vmem:[#allocation2] sm:$0xff] %vm18, 0.0
      %20 = vst.msk [vmem:[#allocation2 + $0x8] sm:$0xff] %vm18, 0.0
    $region13: #{tpu_custom_call.1} parent=1 // pred_fallthru
      _
    %s21 = smul.u32 0, 128
    %v22 = vlaneseq
    %v23 = vand.u32 %v22, 127
    %v24 = vstv %s21
    %v25 = vadd.s32 %v24, %v23
    %v26 = vld [vmem:[%s1] sm:$0xff]
    %v27 = vld [vmem:[%s1 + $0x8] sm:$0xff]
    %28 = vset.pattern.permute.xlu0 0
    %29 = vperm.xlu0 %28, %v26
    %v30 = vpop.permute.xlu0 %29
    %31 = vset.pattern.permute.xlu0 0
    %32 = vperm.xlu0 %31, %v27
    %v33 = vpop.permute.xlu0 %32
    %vm34 = vcmp.eq.s32.totalorder %v30, %v25
    %vm35 = vcmp.eq.s32.totalorder %v33, %v25
    %v36 = vsel %vm34, 1, 0
    %v37 = vsel %vm35, 1, 0
    %v38 = vcvt.s32.f32 %v36
    %v39 = vcvt.s32.f32 %v37
    %v40 = vld [vmem:[#allocation2] sm:$0xff]
    %v41 = vld [vmem:[#allocation2 + $0x8] sm:$0xff]
    %v42 = vld [vmem:[%s2] sm:$0xff]
    %v43 = vld [vmem:[%s2 + $0x8] sm:$0xff]
    %v44 = vld [vmem:[%s2 + $0x10] sm:$0xff]
    %v45 = vld [vmem:[%s2 + $0x18] sm:$0xff]
    %v46 = vld [vmem:[%s2 + $0x20] sm:$0xff]
    %v47 = vld [vmem:[%s2 + $0x28] sm:$0xff]
    %v48 = vld [vmem:[%s2 + $0x30] sm:$0xff]
    %v49 = vld [vmem:[%s2 + $0x38] sm:$0xff]
    %v50 = vld [vmem:[%s2 + $0x40] sm:$0xff]
    %v51 = vld [vmem:[%s2 + $0x48] sm:$0xff]
    %v52 = vld [vmem:[%s2 + $0x50] sm:$0xff]
    %v53 = vld [vmem:[%s2 + $0x58] sm:$0xff]
    %v54 = vld [vmem:[%s2 + $0x60] sm:$0xff]
    %v55 = vld [vmem:[%s2 + $0x68] sm:$0xff]
    %v56 = vld [vmem:[%s2 + $0x70] sm:$0xff]
    %v57 = vld [vmem:[%s2 + $0x78] sm:$0xff]
    %58 = vmatprep.subr.mxu0 0.0
    %59 = vmatpush1.msra.mxu0 %v57
    %60 = vmatprep.subr.mxu0 0.0
    %61 = vmatpush1.msra.mxu0 %v56
    %62 = vmatprep.subr.mxu0 0.0
    %63 = vmatpush1.msra.mxu0 %v55
    %64 = vmatprep.subr.mxu0 0.0
    %65 = vmatpush1.msra.mxu0 %v54
    %66 = vmatprep.subr.mxu0 0.0
    %67 = vmatpush1.msra.mxu0 %v53
    %68 = vmatprep.subr.mxu0 0.0
    %69 = vmatpush1.msra.mxu0 %v52
    %70 = vmatprep.subr.mxu0 0.0
    %71 = vmatpush1.msra.mxu0 %v51
    %72 = vmatprep.subr.mxu0 0.0
    %73 = vmatpush1.msra.mxu0 %v50
    %74 = vmatprep.subr.mxu0 0.0
    %75 = vmatpush1.msra.mxu0 %v49
    %76 = vmatprep.subr.mxu0 0.0
    %77 = vmatpush1.msra.mxu0 %v48
    %78 = vmatprep.subr.mxu0 0.0
    %79 = vmatpush1.msra.mxu0 %v47
    %80 = vmatprep.subr.mxu0 0.0
    %81 = vmatpush1.msra.mxu0 %v46
    %82 = vmatprep.subr.mxu0 0.0
    %83 = vmatpush1.msra.mxu0 %v45
    %84 = vmatprep.subr.mxu0 0.0
    %85 = vmatpush1.msra.mxu0 %v44
    %86 = vmatprep.subr.mxu0 0.0
    %87 = vmatpush1.msra.mxu0 %v43
    %88 = vmatprep.subr.mxu0 0.0
    %89 = vmatpush1.msra.mxu0 %v42
    %90 = vmatprep.subr.mxu0 0.0
    %91 = vmatpush2.msra.mxu0 0.0
    %92 = vmatprep.subr.mxu0 0.0
    %93 = vmatpush2.msra.mxu0 0.0
    %94 = vmatprep.subr.mxu0 0.0
    %95 = vmatpush2.msra.mxu0 0.0
    %96 = vmatprep.subr.mxu0 0.0
    %97 = vmatpush2.msra.mxu0 0.0
    %98 = vmatprep.subr.mxu0 0.0
    %99 = vmatpush2.msra.mxu0 0.0
    %100 = vmatprep.subr.mxu0 0.0
    %101 = vmatpush2.msra.mxu0 0.0
    %102 = vmatprep.subr.mxu0 0.0
    %103 = vmatpush2.msra.mxu0 0.0
    %104 = vmatprep.subr.mxu0 0.0
    %105 = vmatpush2.msra.mxu0 0.0
    %106 = vmatprep.subr.mxu0 0.0
    %107 = vmatpush2.msra.mxu0 0.0
    %108 = vmatprep.subr.mxu0 0.0
    %109 = vmatpush2.msra.mxu0 0.0
    %110 = vmatprep.subr.mxu0 0.0
    %111 = vmatpush2.msra.mxu0 0.0
    %112 = vmatprep.subr.mxu0 0.0
    %113 = vmatpush2.msra.mxu0 0.0
    %114 = vmatprep.subr.mxu0 0.0
    %115 = vmatpush2.msra.mxu0 0.0
    %116 = vmatprep.subr.mxu0 0.0
    %117 = vmatpush2.msra.mxu0 0.0
    %118 = vmatprep.subr.mxu0 0.0
    %119 = vmatpush2.msra.mxu0 0.0
    %120 = vmatprep.subr.mxu0 0.0
    %121 = vmatpush2.msra.mxu0 0.0
    %122 = vmatprep.mubr.f32.mxu0 0.0
    %123 = vmatmul.mubr.f32.gmra.mxu0 %v38
    %v124 = vpop.f32.mrf.mxu0
    %v125 = vadd.f32 0.0, %v124
    %v126 = vpop.f32.mrf.mxu0
    %127 = vmatprep.mubr.f32.mxu0 0.0
    %128 = vmatmul.mubr.f32.gmra.mxu0 %v39
    %v129 = vpop.f32.mrf.mxu0
    %v130 = vadd.f32 0.0, %v129
    %v131 = vpop.f32.mrf.mxu0
    %132 = vdwg.mxu0
    %v133 = vadd.f32 %v40, %v125
    %v134 = vadd.f32 %v41, %v130
    %vm135 = vcmask 261120
    %136 = vst.msk [vmem:[#allocation2] sm:$0xff] %vm135, %v133
    %137 = vst.msk [vmem:[#allocation2 + $0x8] sm:$0xff] %vm135, %v134
    // Predicated region
    $region14: #{tpu_custom_call.1} parent=1 // pred_check
      %p138 = pneg %p14
    $region15: #{tpu_custom_call.1} parent=1 // pred_check_branch
      %140 = sbr.rel (%p138) target = $region17
    $region16: #{tpu_custom_call.1} parent=1 // pred_region
      %v141 = vld [vmem:[#allocation2] sm:$0xff]
      %v142 = vld [vmem:[#allocation2 + $0x8] sm:$0xff]
      %143 = vst.msk [vmem:[#allocation5] sm:$0xff] %vm135, %v141
      %144 = vst.msk [vmem:[#allocation5 + $0x8] sm:$0xff] %vm135, %v142
    $region17: #{tpu_custom_call.1} parent=1 // pred_fallthru
      _
    // Predicated region
    $region18: #{tpu_custom_call.1} parent=1 // pred_check
      _
    $region19: #{tpu_custom_call.1} parent=1 // pred_check_branch
      %146 = sbr.rel (0) target = $region21
    $region20: #{tpu_custom_call.1} parent=1 // pred_region
      %s148 = ssub.s32 256, 256
      %149 = vsyncadd [#allocation6], %s148
      %s150 = sshll.u32 [#allocation5], 4
      %s151 = int_to_ptr.vmem [resolvable:$true] %s150
      %156 = dma.vmem_to_hbm [thread:$0]  %s151, 256, %s3, [#allocation6], 128, 128, 8
    $region21: #{tpu_custom_call.1} parent=1 // pred_fallthru
      _
    // Predicated region
    $region22: #{tpu_custom_call.1} parent=1 // pred_check
      _
    $region23: #{tpu_custom_call.1} parent=1 // pred_check_branch
      %158 = sbr.rel (0) target = $region25
    $region24: #{tpu_custom_call.1} parent=1 // pred_region
      %159 = dma.done [#allocation6], 256
    $region25: #{tpu_custom_call.1} parent=1 // pred_fallthru
      _
    %160 = vsyncpa [#allocation6], 1

</llo_original>
